<compile_context>
chip_gen: v5e
topology: v5e:2x2
jax: 0.10.0
libtpu: 0.0.40
codegen_flags: <defaults>
</compile_context>

<pallas_src>
import jax
import jax.numpy as jnp
import numpy as np
from jax.experimental import pallas as pl
from jax.experimental.pallas import tpu as pltpu


# ---------------------------------------------------------------------------
# hardware-aware sizing helpers
# ---------------------------------------------------------------------------

_LANE = 128      # last-dim alignment (lane width)
_SUBLANE = 16    # second-to-last-dim alignment (bf16 sublane pack; also fine for f32)


def _vmem_capacity_bytes() -> int:
    try:
        return int(pltpu.get_tpu_info().vmem_capacity_bytes)
    except Exception:  # interpret mode / older runtime: assume the smallest (v7x)
        return 64 << 20


def _vmem_limit_bytes() -> int:
    """Scoped-VMEM budget: physical capacity minus ~20 MiB of headroom for
    compiler-internal scratch (v7x -> ~44 MiB, v5e/v6e -> ~108 MiB)."""
    cap = _vmem_capacity_bytes()
    return int(max(cap - (20 << 20), cap // 2))


def _tile_prefs():
    """Per-generation preferred (tm, tn, tk) for bf16 streaming + f32 acc."""
    if _vmem_capacity_bytes() >= (96 << 20):   # v5e / v6e: 128 MiB physical VMEM
        return 1024, 2048, 1024
    return 512, 1024, 1024                     # v7x: 64 MiB per TensorCore


def _round_up(x: int, m: int) -> int:
    return ((x + m - 1) // m) * m


def _choose_tile(dim: int, pref: int, align: int) -> int:
    """Tile of at most ~pref, `align`-aligned; the caller zero-pads `dim` up to
    a tile multiple (avoids the full-extent fallback VMEM cliff for odd dims)."""
    if dim <= pref:
        return dim                    # full extent is always a legal block dim
    nblk = -(-dim // pref)            # cdiv
    return _round_up(-(-dim // nblk), align)


# ---------------------------------------------------------------------------
# kernels
# ---------------------------------------------------------------------------

def _matmul_bias_gelu_kernel(x_ref, w_ref, b_ref, o_ref, acc_ref):
    """o = bloom_gelu(x @ w + b), K-reduction over grid axis 2 (f32 acc)."""
    @pl.when(pl.program_id(2) == 0)
    def _init():
        acc_ref[...] = jnp.zeros_like(acc_ref)

    acc_ref[...] += jnp.dot(
        x_ref[...], w_ref[...], preferred_element_type=jnp.float32
    )

    @pl.when(pl.program_id(2) == pl.num_programs(2) - 1)
    def _finalize():
        h = acc_ref[...] + b_ref[...].astype(jnp.float32)
        # BLOOM tanh-approx GELU applied in the epilogue (no extra HBM pass).
        g = h * 0.5 * (1.0 + jnp.tanh(0.79788456 * h * (1.0 + 0.044715 * h * h)))
        o_ref[...] = g.astype(o_ref.dtype)


def _matmul_bias_residual_kernel(x_ref, w_ref, b_ref, r_ref, o_ref, acc_ref):
    """o = (x @ w + b) + residual   (inference-mode dropout == identity)."""
    @pl.when(pl.program_id(2) == 0)
    def _init():
        acc_ref[...] = jnp.zeros_like(acc_ref)

    acc_ref[...] += jnp.dot(
        x_ref[...], w_ref[...], preferred_element_type=jnp.float32
    )

    @pl.when(pl.program_id(2) == pl.num_programs(2) - 1)
    def _finalize():
        y = (acc_ref[...]
             + b_ref[...].astype(jnp.float32)
             + r_ref[...].astype(jnp.float32))
        o_ref[...] = y.astype(o_ref.dtype)


# ---------------------------------------------------------------------------
# tiled-matmul wrapper with fused epilogue
# ---------------------------------------------------------------------------

def _fused_matmul(kernel, x2, w, b, residual=None, *, out_dtype,
                  transcendentals_per_out=0):
    """out[M, N] = epilogue(x2[M, K] @ w[K, N] + b[N] [, residual[M, N]]).

    Operands are streamed at whatever dtype they arrive in (cast to bf16 in
    the caller for the MXU-native path); accumulation is always f32.
    """
    M, K = x2.shape
    Kw, N = w.shape
    assert K == Kw, (K, Kw)

    tm_pref, tn_pref, tk_pref = _tile_prefs()
    tm = _choose_tile(M, tm_pref, _SUBLANE)
    tn = _choose_tile(N, tn_pref, _LANE)
    tk = _choose_tile(K, tk_pref, _LANE)

    # v7x shards the "parallel" grid axes across its 2 TensorCores: expose at
    # least 2 parallel blocks when the shapes allow it (decode-sized M).
    def _nblk(d, t):
        return -(-d // t)
    for _ in range(8):
        if _nblk(M, tm) * _nblk(N, tn) >= 2:
            break
        if tn % (2 * _LANE) == 0 and tn // 2 >= _LANE:
            tn //= 2
        elif tm % (2 * _SUBLANE) == 0 and tm // 2 >= _SUBLANE:
            tm //= 2
        else:
            break

    Mp, Np, Kp = _round_up(M, tm), _round_up(N, tn), _round_up(K, tk)

    # Zero padding is mathematically transparent: padded K contributes 0 to the
    # dot, padded N columns see zero weights/bias (gelu(0) == 0), padded M rows
    # and N columns are sliced off before returning.
    if (Mp, Kp) != (M, K):
        x2 = jnp.pad(x2, ((0, Mp - M), (0, Kp - K)))
    if (Kp, Np) != (K, N):
        w = jnp.pad(w, ((0, Kp - K), (0, Np - N)))
    b2 = b.reshape(1, N)
    if Np != N:
        b2 = jnp.pad(b2, ((0, 0), (0, Np - N)))
    if residual is not None and (Mp, Np) != (M, N):
        residual = jnp.pad(residual, ((0, Mp - M), (0, Np - N)))

    grid = (Mp // tm, Np // tn, Kp // tk)

    in_specs = [
        pl.BlockSpec((tm, tk), lambda i, j, k: (i, k)),
        pl.BlockSpec((tk, tn), lambda i, j, k: (k, j)),
        pl.BlockSpec((1, tn), lambda i, j, k: (0, j)),
    ]
    args = [x2, w, b2]
    if residual is not None:
        in_specs.append(pl.BlockSpec((tm, tn), lambda i, j, k: (i, j)))
        args.append(residual)

    def _nbytes(a):
        return int(np.prod(a.shape)) * jnp.dtype(a.dtype).itemsize

    cost = pl.CostEstimate(
        flops=2 * Mp * Np * Kp,
        transcendentals=transcendentals_per_out * Mp * Np,
        bytes_accessed=sum(_nbytes(a) for a in args)
        + Mp * Np * jnp.dtype(out_dtype).itemsize,
    )

    out = pl.pallas_call(
        kernel,
        out_shape=jax.ShapeDtypeStruct((Mp, Np), out_dtype),
        grid=grid,
        in_specs=in_specs,
        out_specs=pl.BlockSpec((tm, tn), lambda i, j, k: (i, j)),
        scratch_shapes=[pltpu.VMEM((tm, tn), jnp.float32)],
        compiler_params=pltpu.CompilerParams(
            dimension_semantics=("parallel", "parallel", "arbitrary"),
            vmem_limit_bytes=_vmem_limit_bytes(),
        ),
        cost_estimate=cost,
    )(*args)

    if (Mp, Np) != (M, N):
        out = out[:M, :N]
    return out


# ---------------------------------------------------------------------------
# BloomMLP forward
# ---------------------------------------------------------------------------

def bloom_mlp(hidden_states, residual, w_h_to_4h, b_h_to_4h, w_4h_to_h, b_4h_to_h,
              *, compute_dtype=jnp.bfloat16):
    """BloomMLP forward (inference): gelu(x@W1+b1)@W2 + b2 + residual.

    hidden_states / residual: (..., H); weights stored (in, out).
    Matmul operands are streamed in `compute_dtype` (bf16 -> MXU-native path,
    halves HBM traffic); accumulation, bias, GELU and residual-add stay f32.
    The `slow_but_exact` pretraining_tp path is numerically the same matmul
    and is covered by the single fused kernel.
    """
    orig_shape = hidden_states.shape
    out_dtype = hidden_states.dtype
    H = orig_shape[-1]
    rows = int(np.prod(orig_shape[:-1]))

    x2 = hidden_states.reshape(rows, H).astype(compute_dtype)
    r2 = residual.reshape(rows, H)           # residual is added in the f32 epilogue

    # Weight casts happen once, outside the kernels (ideally the model already
    # stores bf16 weights; for constants XLA folds these casts).
    w1 = w_h_to_4h.astype(compute_dtype)
    w2 = w_4h_to_h.astype(compute_dtype)

    # h -> 4h with bias + tanh-GELU fused; intermediate kept in bf16 so its
    # HBM round trip between the two pallas_calls is halved.
    h4 = _fused_matmul(_matmul_bias_gelu_kernel, x2, w1, b_h_to_4h,
                       out_dtype=compute_dtype, transcendentals_per_out=1)
    # 4h -> h with bias + residual-add fused.
    out = _fused_matmul(_matmul_bias_residual_kernel, h4, w2, b_4h_to_h,
                        residual=r2, out_dtype=out_dtype)
    # TODO(synk): training-mode dropout (dropout_add with p > 0) not implemented;
    # this is the inference forward where dropout is the identity.
    return out.reshape(orig_shape)


# ---------------------------------------------------------------------------
# pure-JAX reference
# ---------------------------------------------------------------------------

def bloom_mlp_ref(hidden_states, residual, w1, b1, w2, b2,
                  compute_dtype=jnp.float32):
    f32 = jnp.float32
    x = hidden_states.astype(compute_dtype).astype(f32)
    w1 = w1.astype(compute_dtype).astype(f32)
    w2 = w2.astype(compute_dtype).astype(f32)
    h = x @ w1 + b1.astype(f32)
    g = h * 0.5 * (1.0 + jnp.tanh(0.79788456 * h * (1.0 + 0.044715 * h * h)))
    g = g.astype(compute_dtype).astype(f32)
    o = g @ w2 + b2.astype(f32) + residual.astype(f32)
    return o.astype(hidden_states.dtype)


# ---------------------------------------------------------------------------
# demo / smoke test
# ---------------------------------------------------------------------------

if __name__ == "__main__":
    key = jax.random.PRNGKey(0)
    batch, seq, hidden = 2, 8, 32
    k1, k2, k3, k4, k5, k6 = jax.random.split(key, 6)

    x = jax.random.normal(k1, (batch, seq, hidden), jnp.float32)
    residual = jax.random.normal(k2, (batch, seq, hidden), jnp.float32)
    w_h_to_4h = jax.random.normal(k3, (hidden, 4 * hidden), jnp.float32) / jnp.sqrt(hidden)
    b_h_to_4h = jax.random.normal(k4, (4 * hidden,), jnp.float32) * 0.02
    w_4h_to_h = jax.random.normal(k5, (4 * hidden, hidden), jnp.float32) / jnp.sqrt(4.0 * hidden)
    b_4h_to_h = jax.random.normal(k6, (hidden,), jnp.float32) * 0.02

    out = bloom_mlp(x, residual, w_h_to_4h, b_h_to_4h, w_4h_to_h, b_4h_to_h)
    out = jax.block_until_ready(out)

    assert out.shape == x.shape and out.dtype == x.dtype

    # Reference emulating the same bf16 streaming path -> tight tolerance.
    ref_bf16 = bloom_mlp_ref(x, residual, w_h_to_4h, b_h_to_4h, w_4h_to_h, b_4h_to_h,
                             compute_dtype=jnp.bfloat16)
    err_bf16 = float(jnp.max(jnp.abs(out - ref_bf16)))
    assert err_bf16 < 2e-2, f"mismatch vs bf16-path reference: max abs err = {err_bf16}"

    # Full-f32 reference -> looser tolerance (bf16 streaming precision).
    ref_f32 = bloom_mlp_ref(x, residual, w_h_to_4h, b_h_to_4h, w_4h_to_h, b_4h_to_h,
                            compute_dtype=jnp.float32)
    err_f32 = float(jnp.max(jnp.abs(out - ref_f32)))
    assert err_f32 < 8e-2, f"mismatch vs f32 reference: max abs err = {err_f32}"

    print("KERNEL_OK")
</pallas_src>

<mosaic_0001>
module attributes {stable_mosaic.version = 11 : i64} {
  func.func @_matmul_bias_gelu_kernel(%arg0: i32, %arg1: i32, %arg2: i32, %arg3: memref<16x32xbf16, #tpu.memory_space<vmem>>, %arg4: memref<32x128xbf16, #tpu.memory_space<vmem>>, %arg5: memref<1x128xf32, #tpu.memory_space<vmem>>, %arg6: memref<16x128xbf16, #tpu.memory_space<vmem>>, %arg7: memref<16x128xf32, #tpu.memory_space<vmem>>) attributes {dimension_semantics = [#tpu.dimension_semantics<parallel>, #tpu.dimension_semantics<parallel>, #tpu.dimension_semantics<arbitrary>], iteration_bounds = array<i64: 1, 1, 1>, scalar_prefetch = 0 : i64, scratch_operands = 1 : i64, tpu.core_type = #tpu.core_type<tc>, window_params = [{transform_indices = @transform_0, window_bounds = array<i64: 16, 32>}, {transform_indices = @transform_1, window_bounds = array<i64: 32, 128>}, {transform_indices = @transform_2, window_bounds = array<i64: 1, 128>}, {transform_indices = @transform_3, window_bounds = array<i64: 16, 128>}]} {
    %c0_i32 = arith.constant 0 : i32
    %0 = arith.cmpi eq, %arg2, %c0_i32 : i32
    %1 = arith.extui %0 : i1 to i32
    %c0_i32_0 = arith.constant 0 : i32
    %2 = arith.cmpi ne, %1, %c0_i32_0 : i32
    scf.if %2 {
      %cst_10 = arith.constant 0.000000e+00 : f32
      %12 = vector.broadcast %cst_10 : f32 to vector<16x128xf32>
      %c0_11 = arith.constant 0 : index
      %c0_12 = arith.constant 0 : index
      %13 = vector.load %arg7[%c0_11, %c0_12] : memref<16x128xf32, #tpu.memory_space<vmem>>, vector<16x128xf32>
      tpu.vector_store %arg7[%c0_11, %c0_12], %12 {strides = array<i32>} : memref<16x128xf32, #tpu.memory_space<vmem>>, vector<16x128xf32>,
    } else {
    }
    %c0 = arith.constant 0 : index
    %c0_1 = arith.constant 0 : index
    %3 = vector.load %arg7[%c0, %c0_1] : memref<16x128xf32, #tpu.memory_space<vmem>>, vector<16x128xf32>
    %c0_2 = arith.constant 0 : index
    %c0_3 = arith.constant 0 : index
    %4 = vector.load %arg3[%c0_2, %c0_3] : memref<16x32xbf16, #tpu.memory_space<vmem>>, vector<16x32xbf16>
    %c0_4 = arith.constant 0 : index
    %c0_5 = arith.constant 0 : index
    %5 = vector.load %arg4[%c0_4, %c0_5] : memref<32x128xbf16, #tpu.memory_space<vmem>>, vector<32x128xbf16>
    %cst = arith.constant dense<0.000000e+00> : vector<16x128xf32>
    %6 = tpu.matmul %4, %5, %cst {dimension_numbers = #tpu.dot_dimension_numbers<[1], [0], [0], [1], [0, 0, 1, 1], [], []>} : vector<16x32xbf16>, vector<32x128xbf16>, vector<16x128xf32> -> vector<16x128xf32>
    %7 = arith.addf %3, %6 : vector<16x128xf32>
    %c0_6 = arith.constant 0 : index
    %c0_7 = arith.constant 0 : index
    %8 = vector.load %arg7[%c0_6, %c0_7] : memref<16x128xf32, #tpu.memory_space<vmem>>, vector<16x128xf32>
    tpu.vector_store %arg7[%c0_6, %c0_7], %7 {strides = array<i32>} : memref<16x128xf32, #tpu.memory_space<vmem>>, vector<16x128xf32>,
    %c0_i32_8 = arith.constant 0 : i32
    %9 = arith.cmpi eq, %arg2, %c0_i32_8 : i32
    %10 = arith.extui %9 : i1 to i32
    %c0_i32_9 = arith.constant 0 : i32
    %11 = arith.cmpi ne, %10, %c0_i32_9 : i32
    scf.if %11 {
      %c0_10 = arith.constant 0 : index
      %c0_11 = arith.constant 0 : index
      %12 = vector.load %arg7[%c0_10, %c0_11] : memref<16x128xf32, #tpu.memory_space<vmem>>, vector<16x128xf32>
      %c0_12 = arith.constant 0 : index
      %c0_13 = arith.constant 0 : index
      %13 = vector.load %arg5[%c0_12, %c0_13] : memref<1x128xf32, #tpu.memory_space<vmem>>, vector<1x128xf32>
      %14 = vector.broadcast %13 : vector<1x128xf32> to vector<16x128xf32>
      %15 = arith.addf %12, %14 : vector<16x128xf32>
      %cst_14 = arith.constant 5.000000e-01 : f32
      %16 = vector.broadcast %cst_14 : f32 to vector<16x128xf32>
      %17 = arith.mulf %15, %16 : vector<16x128xf32>
      %cst_15 = arith.constant 0.797884583 : f32
      %18 = vector.broadcast %cst_15 : f32 to vector<16x128xf32>
      %19 = arith.mulf %18, %15 : vector<16x128xf32>
      %cst_16 = arith.constant 4.471500e-02 : f32
      %20 = vector.broadcast %cst_16 : f32 to vector<16x128xf32>
      %21 = arith.mulf %20, %15 : vector<16x128xf32>
      %22 = arith.mulf %21, %15 : vector<16x128xf32>
      %cst_17 = arith.constant 1.000000e+00 : f32
      %23 = vector.broadcast %cst_17 : f32 to vector<16x128xf32>
      %24 = arith.addf %23, %22 : vector<16x128xf32>
      %25 = arith.mulf %19, %24 : vector<16x128xf32>
      %26 = math.tanh %25 : vector<16x128xf32>
      %cst_18 = arith.constant 1.000000e+00 : f32
      %27 = vector.broadcast %cst_18 : f32 to vector<16x128xf32>
      %28 = arith.addf %27, %26 : vector<16x128xf32>
      %29 = arith.mulf %17, %28 : vector<16x128xf32>
      %30 = arith.truncf %29 : vector<16x128xf32> to vector<16x128xbf16>
      %c0_19 = arith.constant 0 : index
      %c0_20 = arith.constant 0 : index
      %31 = vector.load %arg6[%c0_19, %c0_20] : memref<16x128xbf16, #tpu.memory_space<vmem>>, vector<16x128xbf16>
      tpu.vector_store %arg6[%c0_19, %c0_20], %30 {strides = array<i32>} : memref<16x128xbf16, #tpu.memory_space<vmem>>, vector<16x128xbf16>,
    } else {
    }
    return
  }
  func.func @transform_0(%arg0: i32, %arg1: i32, %arg2: i32) -> (i32, i32) {
    %c0_i32 = arith.constant 0 : i32
    return %arg0, %arg2 : i32, i32
  }
  func.func @transform_1(%arg0: i32, %arg1: i32, %arg2: i32) -> (i32, i32) {
    %c0_i32 = arith.constant 0 : i32
    return %arg2, %arg1 : i32, i32
  }
  func.func @transform_2(%arg0: i32, %arg1: i32, %arg2: i32) -> (i32, i32) {
    %c0_i32 = arith.constant 0 : i32
    %c0_i32_0 = arith.constant 0 : i32
    return %c0_i32, %arg1 : i32, i32
  }
  func.func @transform_3(%arg0: i32, %arg1: i32, %arg2: i32) -> (i32, i32) {
    %c0_i32 = arith.constant 0 : i32
    return %arg0, %arg1 : i32, i32
  }
}

</mosaic_0001>

<llo_original>
// kernel: tpu_custom_call.1
$region0: #{tpu_custom_call.1}
  #allocation0 [shape = 'u32[]', space=smem, size = 0x4, offset = 0x4, fixed_abs, tag = 'smem constant byte address 0x4 - core index']
  #allocation1 [shape = 'u32[72,128]{1,0:T(1,128)}', space=vmem, size = 0x9000, scoped, tag = 'internal scratch']
  #allocation2 [shape = 'f32[16,128]{1,0:T(8,128)}', space=vmem, size = 0x2000, scoped, tag = 'scratch operand']
  %s0 = inlined_call_operand.hbm [shape: bf16[16,32], index: 0, kind: input, shape index: {}]
  %s1 = inlined_call_operand.hbm [shape: bf16[32,128], index: 1, kind: input, shape index: {}]
  %s2 = inlined_call_operand.vmem [shape: f32[1,128], index: 2, kind: input, shape index: {}]
  %s3 = inlined_call_operand.hbm [shape: bf16[16,128], index: 3, kind: output, shape index: {}]
  %s4 = sld [smem:[#allocation0]]
  $region38: #{tpu_custom_call.1} parent=0
    _
  %s6 = ssub.s32 1, %s4
  %s7 = scalar_select 0, %s6, %s4
  $region1: #{tpu_custom_call.1} parent=0
    #allocation3 [shape = 'u8[4096]{0}', space=vmem, size = 0x1000, scoped, tag = 'input window, operand 0, single buffered']
    #allocation4 [shape = 's32[1]{0}', space=sflag, size = 0x4, scoped, tag = 'scoped memory for tpu_custom_call.1']
    #allocation5 [shape = 's32[1]{0}', space=sflag, size = 0x4, scoped, tag = 'scoped memory for tpu_custom_call.1']
    #allocation6 [shape = 'u8[8192]{0}', space=vmem, size = 0x2000, scoped, tag = 'input window, operand 1, single buffered']
    #allocation7 [shape = 's32[1]{0}', space=sflag, size = 0x4, scoped, tag = 'scoped memory for tpu_custom_call.1']
    #allocation8 [shape = 'u8[4096]{0}', space=vmem, size = 0x1000, scoped, tag = 'output window, operand 0, single buffered']
    %8 = vsyncpa [#allocation4], 0
    %9 = vsyncpa [#allocation7], 0
    %10 = vsyncpa [#allocation5], 0
    // Predicated region
    $region2: #{tpu_custom_call.1} parent=1 // pred_check
      _
    $region3: #{tpu_custom_call.1} parent=1 // pred_check_branch
      %12 = sbr.rel (0) target = $region5
    $region4: #{tpu_custom_call.1} parent=1 // pred_region
      %14 = vsyncadd [#allocation4], 0
      %s15 = sshll.u32 %s0, 4
      %s16 = int_to_ptr.hbm [resolvable:$true] %s15
      %s17 = sshll.u32 [#allocation3], 4
      %s18 = int_to_ptr.vmem [resolvable:$true] %s17
      %23 = dma.hbm_to_vmem [thread:$0]  %s16, 128, %s18, [#allocation4], 64, 64, 4
    $region5: #{tpu_custom_call.1} parent=1 // pred_fallthru
      _
    // Predicated region
    $region6: #{tpu_custom_call.1} parent=1 // pred_check
      _
    $region7: #{tpu_custom_call.1} parent=1 // pred_check_branch
      %25 = sbr.rel (0) target = $region9
    $region8: #{tpu_custom_call.1} parent=1 // pred_region
      %27 = vsyncadd [#allocation7], 0
      %s28 = sshll.u32 %s1, 4
      %s29 = int_to_ptr.hbm [resolvable:$true] %s28
      %s30 = sshll.u32 [#allocation6], 4
      %s31 = int_to_ptr.vmem [resolvable:$true] %s30
      %36 = dma.hbm_to_vmem [thread:$0]  %s29, 256, %s31, [#allocation7], 64, 64, 4
    $region9: #{tpu_custom_call.1} parent=1 // pred_fallthru
      _
    // Predicated region
    $region10: #{tpu_custom_call.1} parent=1 // pred_check
      _
    $region11: #{tpu_custom_call.1} parent=1 // pred_check_branch
      %38 = sbr.rel (0) target = $region13
    $region12: #{tpu_custom_call.1} parent=1 // pred_region
      _
    $region13: #{tpu_custom_call.1} parent=1 // pred_fallthru
      _
    // Predicated region
    $region14: #{tpu_custom_call.1} parent=1 // pred_check
      _
    $region15: #{tpu_custom_call.1} parent=1 // pred_check_branch
      %40 = sbr.rel (0) target = $region17
    $region16: #{tpu_custom_call.1} parent=1 // pred_region
      %42 = dma.done [#allocation4], 128
    $region17: #{tpu_custom_call.1} parent=1 // pred_fallthru
      _
    // Predicated region
    $region18: #{tpu_custom_call.1} parent=1 // pred_check
      _
    $region19: #{tpu_custom_call.1} parent=1 // pred_check_branch
      %44 = sbr.rel (0) target = $region21
    $region20: #{tpu_custom_call.1} parent=1 // pred_region
      %46 = dma.done [#allocation7], 256
    $region21: #{tpu_custom_call.1} parent=1 // pred_fallthru
      _
    %p48 = scmp.eq.s32.totalorder 0, 0
    // Predicated region
    $region22: #{tpu_custom_call.1} parent=1 // pred_check
      %p49 = pneg %p48
    $region23: #{tpu_custom_call.1} parent=1 // pred_check_branch
      %51 = sbr.rel (%p49) target = $region25
    $region24: #{tpu_custom_call.1} parent=1 // pred_region
      %52 = vst [vmem:[#allocation2] sm:$0xff] 0.0
      %53 = vst [vmem:[#allocation2 + $0x8] sm:$0xff] 0.0
    $region25: #{tpu_custom_call.1} parent=1 // pred_fallthru
      _
    %v54 = vld [vmem:[#allocation2] sm:$0xff]
    %v55 = vld [vmem:[#allocation2 + $0x8] sm:$0xff]
    %v56 = vld [vmem:[#allocation3] sm:$0xf]
    %v57 = vld [vmem:[#allocation3 + $0x4] sm:$0xf]
    %v58 = vld [vmem:[#allocation6] sm:$0xf]
    %v59 = vld [vmem:[#allocation6 + $0x4] sm:$0xf]
    %v60 = vld [vmem:[#allocation6 + $0x8] sm:$0xf]
    %v61 = vld [vmem:[#allocation6 + $0xc] sm:$0xf]
    %v64 = vunpack.c.l.b16 %v56
    %v65 = vunpack.c.l.b16 %v57
    %v66 = vpack.c.b16 %v65, %v64
    %v71 = vunpack.c.l.b16 %v58
    %v72 = vunpack.c.l.b16 %v59
    %v73 = vunpack.c.l.b16 %v60
    %v74 = vunpack.c.l.b16 %v61
    %v75 = vpack.c.b16 %v72, %v71
    %v76 = vpack.c.b16 %v74, %v73
    %vm79 = vcmask 261120
    %v81 = vsel %vm79, %v66, 0
    %83 = vmatpush.bf16.msra.mxu0 0
    %84 = vmatpush.bf16.msra.mxu0 0
    %85 = vmatpush.bf16.msra.mxu0 0
    %86 = vmatpush.bf16.msra.mxu0 0
    %87 = vmatpush.bf16.msra.mxu0 0
    %88 = vmatpush.bf16.msra.mxu0 0
    %89 = vmatpush.bf16.msra.mxu0 %v76
    %90 = vmatpush.bf16.msra.mxu0 %v75
    %91 = vmatmul.bf16.gmra.mxu0 %v81
    %v92 = vpop.f32.mrf.mxu0
    %v93 = vadd.f32 0.0, %v92
    %v94 = vpop.f32.mrf.mxu0
    %v95 = vadd.f32 0.0, %v94
    %96 = vdwg.mxu0
    %v97 = vadd.f32 %v54, %v93
    %v98 = vadd.f32 %v55, %v95
    %99 = vst [vmem:[#allocation2] sm:$0xff] %v97
    %100 = vst [vmem:[#allocation2 + $0x8] sm:$0xff] %v98
    // Predicated region
    $region26: #{tpu_custom_call.1} parent=1 // pred_check
      %p101 = pneg %p48
    $region27: #{tpu_custom_call.1} parent=1 // pred_check_branch
      %103 = sbr.rel (%p101) target = $region29
    $region28: #{tpu_custom_call.1} parent=1 // pred_region
      %v104 = vld [vmem:[#allocation2] sm:$0xff]
      %v105 = vld [vmem:[#allocation2 + $0x8] sm:$0xff]
      %v106 = vld [vmem:[%s2] sm:$0x1]
      %v108 = vperm.slane %v106, 0
      %v110 = vadd.f32 %v104, %v108
      %v111 = vadd.f32 %v105, %v108
      %v112 = vmul.f32 %v110, 0.5
      %v113 = vmul.f32 %v111, 0.5
      %v114 = vmul.f32 %v110, 0.7978846
      %v115 = vmul.f32 %v111, 0.7978846
      %v116 = vmul.f32 %v110, 0.044715
      %v117 = vmul.f32 %v111, 0.044715
      %v118 = vmul.f32 %v116, %v110
      %v119 = vmul.f32 %v117, %v111
      %v120 = vadd.f32 %v118, 1.0
      %v121 = vadd.f32 %v119, 1.0
      %v122 = vmul.f32 %v114, %v120
      %v123 = vmul.f32 %v115, %v121
      %v124 = vtanh.pop %v122
      %v125 = vtanh.pop %v123
      %v126 = vadd.f32 %v124, 1.0
      %v127 = vadd.f32 %v125, 1.0
      %v128 = vmul.f32 %v112, %v126
      %v129 = vmul.f32 %v113, %v127
      %v130 = vpack.c.bf16 %v128, %v128
      %v131 = vpack.c.bf16 %v129, %v129
      %132 = vst [vmem:[#allocation8] sm:$0xf] %v130
      %133 = vst [vmem:[#allocation8 + $0x4] sm:$0xf] %v131
    $region29: #{tpu_custom_call.1} parent=1 // pred_fallthru
      _
    // Predicated region
    $region30: #{tpu_custom_call.1} parent=1 // pred_check
      _
    $region31: #{tpu_custom_call.1} parent=1 // pred_check_branch
      %135 = sbr.rel (0) target = $region33
    $region32: #{tpu_custom_call.1} parent=1 // pred_region
      %137 = vsyncadd [#allocation5], 0
      %s138 = sshll.u32 [#allocation8], 4
      %s139 = int_to_ptr.vmem [resolvable:$true] %s138
      %s140 = sshll.u32 %s3, 4
      %s141 = int_to_ptr.hbm [resolvable:$true] %s140
      %146 = dma.vmem_to_hbm [thread:$0]  %s139, 128, %s141, [#allocation5], 64, 64, 4
    $region33: #{tpu_custom_call.1} parent=1 // pred_fallthru
      _
    // Predicated region
    $region34: #{tpu_custom_call.1} parent=1 // pred_check
      _
    $region35: #{tpu_custom_call.1} parent=1 // pred_check_branch
      %148 = sbr.rel (0) target = $region37
    $region36: #{tpu_custom_call.1} parent=1 // pred_region
      %150 = dma.done [#allocation5], 128
    $region37: #{tpu_custom_call.1} parent=1 // pred_fallthru
      _
    %151 = vsyncpa [#allocation4], 1
    %152 = vsyncpa [#allocation7], 1
    %153 = vsyncpa [#allocation5], 1

</llo_original>
